<compile_context>
chip_gen: v6e
topology: v6e:2x2x1
jax: 0.10.0
libtpu: 0.0.40
codegen_flags: <defaults>
</compile_context>

<pallas_src>
import jax
import jax.numpy as jnp
from jax.experimental import pallas as pl
from jax.experimental.pallas import tpu as pltpu


def _add_fuse_kernel(a_ref, b_ref, o_ref):
    # Elementwise (a + b) * 0.5 on the VPU over the whole VMEM tile.
    o_ref[...] = (a_ref[...] + b_ref[...]) * 0.5


def _round_up(x: int, m: int) -> int:
    return (x + m - 1) // m * m


_TINY_BYTES = 256 * 1024            # below this, plain jnp beats kernel launch
_TARGET_BLOCK_BYTES = 4 * 1024 * 1024
_MAX_LANES = 8192


def _pick_lane_width(total: int):
    """Largest multiple of 128 (<= _MAX_LANES) that divides `total`, or None."""
    for lanes in range(_MAX_LANES, 0, -128):
        if total % lanes == 0:
            return lanes
    return None


def _tiled_mean_2d(x2d: jax.Array, y2d: jax.Array) -> jax.Array:
    """(x2d + y2d) * 0.5 via a tiled, double-buffered streaming Pallas kernel."""
    rows, cols = x2d.shape
    itemsize = jnp.dtype(x2d.dtype).itemsize
    # Sublane granularity: 8 for 4-byte, 16 for 2-byte, 32 for 1-byte dtypes.
    sub = max(8, 32 // itemsize)

    # Lane-dense column tile: multiple of 128, capped at 8192 lanes.
    block_c = min(_MAX_LANES, _round_up(cols, 128))

    # Row tile sized so each block is ~4 MiB.
    block_r = max(sub, (_TARGET_BLOCK_BYTES // (block_c * itemsize)) // sub * sub)
    block_r = min(block_r, _round_up(rows, sub))

    # Megacore: guarantee >= 4 row steps where possible (so each of v7x's two
    # TensorCores still has >= 2 steps to double-buffer DMA); if rows can't be
    # split further, halve the column tile instead (keeping a multiple of 128).
    if pl.cdiv(rows, block_r) < 4:
        block_r = max(sub, _round_up(pl.cdiv(rows, 4), sub))
        block_r = min(block_r, _round_up(rows, sub))
    if pl.cdiv(rows, block_r) * pl.cdiv(cols, block_c) < 2 and block_c > 128:
        block_c = max(128, _round_up(pl.cdiv(block_c, 2), 128))

    grid = (pl.cdiv(rows, block_r), pl.cdiv(cols, block_c))

    # 3 operands x 2 pipeline buffers + slack; stays inside v7x's 64 MiB/TC.
    block_bytes = block_r * block_c * itemsize
    vmem_limit = min(48 * 1024 * 1024,
                     max(16 * 1024 * 1024, 3 * 2 * block_bytes + (2 << 20)))

    cost = pl.CostEstimate(flops=2 * rows * cols,
                           transcendentals=0,
                           bytes_accessed=3 * rows * cols * itemsize)

    return pl.pallas_call(
        _add_fuse_kernel,
        out_shape=jax.ShapeDtypeStruct((rows, cols), x2d.dtype),
        grid=grid,
        in_specs=[
            pl.BlockSpec((block_r, block_c), lambda i, j: (i, j)),
            pl.BlockSpec((block_r, block_c), lambda i, j: (i, j)),
        ],
        out_specs=pl.BlockSpec((block_r, block_c), lambda i, j: (i, j)),
        compiler_params=pltpu.CompilerParams(
            dimension_semantics=("parallel", "parallel"),
            vmem_limit_bytes=vmem_limit),
        cost_estimate=cost,
    )(x2d, y2d)


def add_fuse(x: jax.Array, y: jax.Array) -> jax.Array:
    """(x + y) / 2 for NCHW feature maps."""
    assert x.shape == y.shape
    assert x.dtype == y.dtype

    B, C, H, W = x.shape
    total = B * C * H * W
    itemsize = jnp.dtype(x.dtype).itemsize

    # Tiny-input fast path: kernel launch + DMA setup overhead dominates; let
    # XLA's fused elementwise handle it.
    if total * itemsize < _TINY_BYTES:
        return (x + y) * 0.5

    lanes = _pick_lane_width(total)
    if lanes is not None:
        # Lane-dense slab: every block store is a full, unmasked vst.
        rows, cols = total // lanes, lanes
    else:
        # Fallback: natural (B*C, H*W) view with masked edge blocks.
        rows, cols = B * C, H * W

    out2d = _tiled_mean_2d(x.reshape(rows, cols), y.reshape(rows, cols))
    return out2d.reshape(B, C, H, W)


def add_fuse_forward(data_dict: dict) -> dict:
    """Mirrors AddFuse.forward: updates 'spatial_features_2d' in the dict."""
    data_dict['spatial_features_2d'] = add_fuse(
        data_dict['spatial_features_2d'],
        data_dict['spatial_features_2d_dpc'],
    )
    return data_dict


if __name__ == "__main__":
    key = jax.random.PRNGKey(0)
    k1, k2, k3, k4, k5, k6 = jax.random.split(key, 6)

    # 1) Module-sized test (tiny fast path) through the dict-based forward.
    B, C, H, W = 2, 4, 16, 16
    x = jax.random.normal(k1, (B, C, H, W), dtype=jnp.float32)
    x_dpc = jax.random.normal(k2, (B, C, H, W), dtype=jnp.float32)
    data_dict = {'spatial_features_2d': x, 'spatial_features_2d_dpc': x_dpc}
    out = jax.block_until_ready(
        add_fuse_forward(data_dict)['spatial_features_2d'])
    ref = (x + x_dpc) / 2.0
    assert out.shape == (B, C, H, W)
    assert out.dtype == x.dtype
    assert jnp.allclose(out, ref, atol=1e-6, rtol=1e-6)

    # 2) Pallas path: 128-divisible total -> lane-dense slab, f32.
    a = jax.random.normal(k3, (2, 32, 64, 64), dtype=jnp.float32)
    b = jax.random.normal(k4, (2, 32, 64, 64), dtype=jnp.float32)
    out2 = jax.block_until_ready(add_fuse(a, b))
    assert out2.shape == a.shape and out2.dtype == a.dtype
    assert jnp.allclose(out2, (a + b) / 2.0, atol=1e-6, rtol=1e-6)

    # 3) Pallas path: odd total + bf16 -> masked-edge fallback tiling.
    c = jax.random.normal(k5, (3, 33, 45, 37), dtype=jnp.bfloat16)
    d = jax.random.normal(k6, (3, 33, 45, 37), dtype=jnp.bfloat16)
    out3 = jax.block_until_ready(add_fuse(c, d))
    ref3 = (c.astype(jnp.float32) + d.astype(jnp.float32)) / 2.0
    assert out3.shape == c.shape and out3.dtype == c.dtype
    assert jnp.allclose(out3.astype(jnp.float32), ref3, atol=1e-2, rtol=1e-2)

    print("KERNEL_OK")
</pallas_src>

<mosaic_0001>
module attributes {stable_mosaic.version = 11 : i64} {
  func.func @_add_fuse_kernel(%arg0: i32, %arg1: i32, %arg2: memref<8x8192xf32, #tpu.memory_space<vmem>>, %arg3: memref<8x8192xf32, #tpu.memory_space<vmem>>, %arg4: memref<8x8192xf32, #tpu.memory_space<vmem>>) attributes {dimension_semantics = [#tpu.dimension_semantics<parallel>, #tpu.dimension_semantics<parallel>], iteration_bounds = array<i64: 4, 1>, scalar_prefetch = 0 : i64, scratch_operands = 0 : i64, tpu.core_type = #tpu.core_type<tc>, window_params = [{transform_indices = @transform_0, window_bounds = array<i64: 8, 8192>}, {transform_indices = @transform_1, window_bounds = array<i64: 8, 8192>}, {transform_indices = @transform_2, window_bounds = array<i64: 8, 8192>}]} {
    %c0 = arith.constant 0 : index
    %c0_0 = arith.constant 0 : index
    %0 = vector.load %arg2[%c0, %c0_0] : memref<8x8192xf32, #tpu.memory_space<vmem>>, vector<8x8192xf32>
    %c0_1 = arith.constant 0 : index
    %c0_2 = arith.constant 0 : index
    %1 = vector.load %arg3[%c0_1, %c0_2] : memref<8x8192xf32, #tpu.memory_space<vmem>>, vector<8x8192xf32>
    %2 = arith.addf %0, %1 : vector<8x8192xf32>
    %cst = arith.constant 5.000000e-01 : f32
    %3 = vector.broadcast %cst : f32 to vector<8x8192xf32>
    %4 = arith.mulf %2, %3 : vector<8x8192xf32>
    %c0_3 = arith.constant 0 : index
    %c0_4 = arith.constant 0 : index
    %5 = vector.load %arg4[%c0_3, %c0_4] : memref<8x8192xf32, #tpu.memory_space<vmem>>, vector<8x8192xf32>
    tpu.vector_store %arg4[%c0_3, %c0_4], %4 {strides = array<i32>} : memref<8x8192xf32, #tpu.memory_space<vmem>>, vector<8x8192xf32>,
    return
  }
  func.func @transform_0(%arg0: i32, %arg1: i32) -> (i32, i32) {
    %c0_i32 = arith.constant 0 : i32
    return %arg0, %arg1 : i32, i32
  }
  func.func @transform_1(%arg0: i32, %arg1: i32) -> (i32, i32) {
    %c0_i32 = arith.constant 0 : i32
    return %arg0, %arg1 : i32, i32
  }
  func.func @transform_2(%arg0: i32, %arg1: i32) -> (i32, i32) {
    %c0_i32 = arith.constant 0 : i32
    return %arg0, %arg1 : i32, i32
  }
}

</mosaic_0001>

<llo_original>
// kernel: tpu_custom_call.1
$region0: #{tpu_custom_call.1}
  #allocation0 [shape = 'u32[]', space=smem, size = 0x4, offset = 0x4, fixed_abs, tag = 'smem constant byte address 0x4 - core index']
  #allocation1 [shape = 'u32[144,128]{1,0:T(1,128)}', space=vmem, size = 0x12000, scoped, tag = 'internal scratch']
  %s0 = inlined_call_operand.hbm [shape: f32[32,8192], index: 0, kind: input, shape index: {}]
  %s1 = inlined_call_operand.hbm [shape: f32[32,8192], index: 1, kind: input, shape index: {}]
  %s2 = inlined_call_operand.hbm [shape: f32[32,8192], index: 2, kind: output, shape index: {}]
  %s3 = sld [smem:[#allocation0]]
  $region49: #{tpu_custom_call.1} parent=0
    _
  %s5 = ssub.s32 1, %s3
  %s6 = scalar_select 0, %s5, %s3
  $region1: #{tpu_custom_call.1} parent=0
    #allocation2 [shape = 'u8[524288]{0}', space=vmem, size = 0x80000, scoped, tag = 'input window, operand 0']
    #allocation3 [shape = 's32[2]{0}', space=sflag, size = 0x8, scoped, tag = 'scoped memory for tpu_custom_call.1']
    #allocation4 [shape = 's32[2]{0}', space=sflag, size = 0x8, scoped, tag = 'scoped memory for tpu_custom_call.1']
    #allocation5 [shape = 'u8[524288]{0}', space=vmem, size = 0x80000, scoped, tag = 'input window, operand 1']
    #allocation6 [shape = 's32[2]{0}', space=sflag, size = 0x8, scoped, tag = 'scoped memory for tpu_custom_call.1']
    #allocation7 [shape = 'u8[524288]{0}', space=vmem, size = 0x80000, scoped, tag = 'output window, operand 0']
    %7 = vsyncpa [#allocation3], 0
    %s8 = scalar_lea.sflag [#allocation3], 1
    %9 = vsyncpa %s8, 0
    %10 = vsyncpa [#allocation6], 0
    %s11 = scalar_lea.sflag [#allocation6], 1
    %12 = vsyncpa %s11, 0
    %13 = vsyncpa [#allocation4], 0
    %s14 = scalar_lea.sflag [#allocation4], 1
    %15 = vsyncpa %s14, 0
    loop: start=0, step=1, limit=6
    $region2: #{tpu_custom_call.1} parent=1 // loop_pre_header
      _
    $region3: #{tpu_custom_call.1} parent=1 // loop_header
      %s17 = sphi 0, %s21
      %p18 = scmp.ge.s32.totalorder %s17, 6
      %s24 = sphi 0, %s36
      %s25 = sphi 0, %s32
      %s26 = sphi 0, %s24
      %s27 = sphi 0, %s25
      %s28 = sphi 0, %s26
      %s29 = sphi 0, %s27
      %s41 = sphi 0, %s43
      %s44 = sphi 0, %s41
      %s45 = sphi 0, %s44
      %s61 = sphi 0, %s45
      %s69 = sphi 0, %s71
      %s72 = sphi 0, %s69
      %s73 = sphi 0, %s72
      %s89 = sphi 0, %s73
      %s97 = sphi 0, %s99
      %s100 = sphi 0, %s97
      %s101 = sphi 0, %s100
      %s117 = sphi 0, %s101
    $region4: #{tpu_custom_call.1} parent=1 // loop_header_branch
      %20 = sbr.rel (%p18) target = $region8
    $region5: #{tpu_custom_call.1} parent=1 // loop_body
      %s22 = ssub.s32 %s17, 1
      %s23 = ssub.s32 %s17, 2
      %s30 = sadd.s32 1, %s25
      %p31 = scmp.ge.s32.totalorder %s30, 1
      %s32 = scalar_select %p31, 0, %s30
      %s33 = sadd.s32 1, %s24
      %s34 = scalar_select %p31, %s33, %s24
      %p35 = scmp.ge.s32.totalorder %s34, 4
      %s36 = scalar_select %p35, 0, %s34
      %s37 = ssub.s32 %s24, %s36
      %s38 = ssub.s32 %s25, %s32
      %s39 = sor.u32 %s37, %s38
      %p40 = scmp.eq.s32.totalorder %s39, 0
      %s42 = sadd.s32 %s41, 1
      %s43 = scalar_select %p40, %s41, %s42
      %p46 = pneg %p40
      %p47 = scmp.eq.s32.totalorder %s17, 3
      %p48 = por %p46, %p47
      %p49 = scmp.ne.s32.totalorder %s41, %s44
      %p50 = scmp.eq.s32.totalorder %s17, 0
      %p51 = por %p49, %p50
      %p52 = scmp.ne.s32.totalorder %s41, %s44
      %p53 = scmp.eq.s32.totalorder %s22, 3
      %p54 = por %p52, %p53
      %p55 = scmp.ne.s32.totalorder %s44, %s45
      %p56 = scmp.eq.s32.totalorder %s22, 0
      %p57 = por %p55, %p56
      %p58 = scmp.ne.s32.totalorder %s44, %s45
      %p59 = scmp.eq.s32.totalorder %s23, 3
      %p60 = por %p58, %p59
      %p62 = scmp.ne.s32.totalorder %s45, %s61
      %p63 = scmp.eq.s32.totalorder %s23, 0
      %p64 = por %p62, %p63
      %s65 = ssub.s32 %s24, %s36
      %s66 = ssub.s32 %s25, %s32
      %s67 = sor.u32 %s65, %s66
      %p68 = scmp.eq.s32.totalorder %s67, 0
      %s70 = sadd.s32 %s69, 1
      %s71 = scalar_select %p68, %s69, %s70
      %p74 = pneg %p68
      %p75 = scmp.eq.s32.totalorder %s17, 3
      %p76 = por %p74, %p75
      %p77 = scmp.ne.s32.totalorder %s69, %s72
      %p78 = scmp.eq.s32.totalorder %s17, 0
      %p79 = por %p77, %p78
      %p80 = scmp.ne.s32.totalorder %s69, %s72
      %p81 = scmp.eq.s32.totalorder %s22, 3
      %p82 = por %p80, %p81
      %p83 = scmp.ne.s32.totalorder %s72, %s73
      %p84 = scmp.eq.s32.totalorder %s22, 0
      %p85 = por %p83, %p84
      %p86 = scmp.ne.s32.totalorder %s72, %s73
      %p87 = scmp.eq.s32.totalorder %s23, 3
      %p88 = por %p86, %p87
      %p90 = scmp.ne.s32.totalorder %s73, %s89
      %p91 = scmp.eq.s32.totalorder %s23, 0
      %p92 = por %p90, %p91
      %s93 = ssub.s32 %s24, %s36
      %s94 = ssub.s32 %s25, %s32
      %s95 = sor.u32 %s93, %s94
      %p96 = scmp.eq.s32.totalorder %s95, 0
      %s98 = sadd.s32 %s97, 1
      %s99 = scalar_select %p96, %s97, %s98
      %p102 = pneg %p96
      %p103 = scmp.eq.s32.totalorder %s17, 3
      %p104 = por %p102, %p103
      %p105 = scmp.ne.s32.totalorder %s97, %s100
      %p106 = scmp.eq.s32.totalorder %s17, 0
      %p107 = por %p105, %p106
      %p108 = scmp.ne.s32.totalorder %s97, %s100
      %p109 = scmp.eq.s32.totalorder %s22, 3
      %p110 = por %p108, %p109
      %p111 = scmp.ne.s32.totalorder %s100, %s101
      %p112 = scmp.eq.s32.totalorder %s22, 0
      %p113 = por %p111, %p112
      %p114 = scmp.ne.s32.totalorder %s100, %s101
      %p115 = scmp.eq.s32.totalorder %s23, 3
      %p116 = por %p114, %p115
      %p118 = scmp.ne.s32.totalorder %s101, %s117
      %p119 = scmp.eq.s32.totalorder %s23, 0
      %p120 = por %p118, %p119
      %p121 = scmp.le.s32.totalorder 1, %s17
      %p122 = scmp.lt.s32.totalorder %s17, 5
      %p123 = pnand %p121, %p122
      %p124 = pneg %p123
      // Predicated region
      $region9: #{tpu_custom_call.1} parent=5 // pred_check
        _
      $region10: #{tpu_custom_call.1} parent=5 // pred_check_branch
        %126 = sbr.rel (%p123) target = $region12
      $region11: #{tpu_custom_call.1} parent=5 // pred_region
        %s127 = ssub.s32 %s17, 1
      $region12: #{tpu_custom_call.1} parent=5 // pred_fallthru
        _
      %p128 = scmp.lt.s32.totalorder %s17, 4
      // Predicated region
      $region13: #{tpu_custom_call.1} parent=5 // pred_check
        %p129 = pneg %p128
      $region14: #{tpu_custom_call.1} parent=5 // pred_check_branch
        %131 = sbr.rel (%p129) target = $region16
      $region15: #{tpu_custom_call.1} parent=5 // pred_region
        // Predicated region
        $region17: #{tpu_custom_call.1} parent=15 // pred_check
          %p132 = pneg %p51
        $region18: #{tpu_custom_call.1} parent=15 // pred_check_branch
          %134 = sbr.rel (%p132) target = $region20
        $region19: #{tpu_custom_call.1} parent=15 // pred_region
          %s135 = sand.u32 %s41, 1
          %s136 = scalar_lea.sflag [#allocation3], %s135
          %s137 = sand.u32 %s41, 1
          %s138 = smul.addr %s137, 512
          %s139 = scalar_lea.vmem [#allocation2], %s138
          %s140 = smul.u32 64, %s25
          %s142 = ssub.s32 8192, 8192
          %143 = vsyncadd %s136, %s142
          %s144 = smul.addr %s24, 64
          %s145 = sadd.s32 %s140, %s144
          %s146 = smul.addr %s145, 128
          %s147 = scalar_lea.hbm %s0, %s146
          %s149 = sshll.u32 %s139, 4
          %s150 = int_to_ptr.vmem [resolvable:$true] %s149
          %152 = dma.hbm_to_vmem [thread:$0]  %s147, 8192, %s150, %s136
        $region20: #{tpu_custom_call.1} parent=15 // pred_fallthru
          _
        // Predicated region
        $region21: #{tpu_custom_call.1} parent=15 // pred_check
          %p153 = pneg %p79
        $region22: #{tpu_custom_call.1} parent=15 // pred_check_branch
          %155 = sbr.rel (%p153) target = $region24
        $region23: #{tpu_custom_call.1} parent=15 // pred_region
          %s156 = sand.u32 %s69, 1
          %s157 = scalar_lea.sflag [#allocation6], %s156
          %s158 = sand.u32 %s69, 1
          %s159 = smul.addr %s158, 512
          %s160 = scalar_lea.vmem [#allocation5], %s159
          %s161 = smul.u32 64, %s25
          %s163 = ssub.s32 8192, 8192
          %164 = vsyncadd %s157, %s163
          %s165 = smul.addr %s24, 64
          %s166 = sadd.s32 %s161, %s165
          %s167 = smul.addr %s166, 128
          %s168 = scalar_lea.hbm %s1, %s167
          %s170 = sshll.u32 %s160, 4
          %s171 = int_to_ptr.vmem [resolvable:$true] %s170
          %173 = dma.hbm_to_vmem [thread:$0]  %s168, 8192, %s171, %s157
        $region24: #{tpu_custom_call.1} parent=15 // pred_fallthru
          _
      $region16: #{tpu_custom_call.1} parent=5 // pred_fallthru
        _
      %p174 = scmp.le.s32.totalorder 1, %s17
      %p175 = scmp.lt.s32.totalorder %s17, 5
      %p176 = pnand %p174, %p175
      %p177 = pneg %p176
      // Predicated region
      $region25: #{tpu_custom_call.1} parent=5 // pred_check
        _
      $region26: #{tpu_custom_call.1} parent=5 // pred_check_branch
        %179 = sbr.rel (%p176) target = $region28
      $region27: #{tpu_custom_call.1} parent=5 // pred_region
        %s180 = ssub.s32 %s17, 1
        %s181 = sand.u32 %s44, 1
        %s182 = scalar_lea.sflag [#allocation3], %s181
        %s183 = sand.u32 %s44, 1
        %s184 = smul.addr %s183, 512
        %s185 = scalar_lea.vmem [#allocation2], %s184
        // Predicated region
        $region29: #{tpu_custom_call.1} parent=27 // pred_check
          %p186 = pneg %p57
        $region30: #{tpu_custom_call.1} parent=27 // pred_check_branch
          %188 = sbr.rel (%p186) target = $region32
        $region31: #{tpu_custom_call.1} parent=27 // pred_region
          %189 = dma.done %s182, 8192
        $region32: #{tpu_custom_call.1} parent=27 // pred_fallthru
          _
        %s190 = sand.u32 %s72, 1
        %s191 = scalar_lea.sflag [#allocation6], %s190
        %s192 = sand.u32 %s72, 1
        %s193 = smul.addr %s192, 512
        %s194 = scalar_lea.vmem [#allocation5], %s193
        // Predicated region
        $region33: #{tpu_custom_call.1} parent=27 // pred_check
          %p195 = pneg %p85
        $region34: #{tpu_custom_call.1} parent=27 // pred_check_branch
          %197 = sbr.rel (%p195) target = $region36
        $region35: #{tpu_custom_call.1} parent=27 // pred_region
          %198 = dma.done %s191, 8192
        $region36: #{tpu_custom_call.1} parent=27 // pred_fallthru
          _
        %s199 = sand.u32 %s44, 1
        %s200 = scalar_lea.sflag [#allocation3], %s199
        %s201 = sand.u32 %s44, 1
        %s202 = smul.addr %s201, 512
        %s203 = scalar_lea.vmem [#allocation2], %s202
        %p204 = pneg %p57
        %p205 = pneg %p54
        %s206 = sand.u32 %s72, 1
        %s207 = scalar_lea.sflag [#allocation6], %s206
        %s208 = sand.u32 %s72, 1
        %s209 = smul.addr %s208, 512
        %s210 = scalar_lea.vmem [#allocation5], %s209
        %p211 = pneg %p85
        %p212 = pneg %p82
        %p213 = pneg %p113
        %p214 = pneg %p110
        %s215 = sand.u32 %s100, 1
        %s216 = scalar_lea.sflag [#allocation4], %s215
        %s217 = sand.u32 %s100, 1
        %s218 = smul.addr %s217, 512
        %s219 = scalar_lea.vmem [#allocation7], %s218
        %s220 = smul.u32 64, %s27
        %s221 = smul.u32 64, %s27
        %s222 = smul.u32 64, %s27
        %v223 = vld [vmem:[%s185] sm:$0xff]
        %v224 = vld [vmem:[%s185 + $0x8] sm:$0xff]
        %v225 = vld [vmem:[%s185 + $0x10] sm:$0xff]
        %v226 = vld [vmem:[%s185 + $0x18] sm:$0xff]
        %v227 = vld [vmem:[%s185 + $0x20] sm:$0xff]
        %v228 = vld [vmem:[%s185 + $0x28] sm:$0xff]
        %v229 = vld [vmem:[%s185 + $0x30] sm:$0xff]
        %v230 = vld [vmem:[%s185 + $0x38] sm:$0xff]
        %v231 = vld [vmem:[%s185 + $0x40] sm:$0xff]
        %v232 = vld [vmem:[%s185 + $0x48] sm:$0xff]
        %v233 = vld [vmem:[%s185 + $0x50] sm:$0xff]
        %v234 = vld [vmem:[%s185 + $0x58] sm:$0xff]
        %v235 = vld [vmem:[%s185 + $0x60] sm:$0xff]
        %v236 = vld [vmem:[%s185 + $0x68] sm:$0xff]
        %v237 = vld [vmem:[%s185 + $0x70] sm:$0xff]
        %v238 = vld [vmem:[%s185 + $0x78] sm:$0xff]
        %v239 = vld [vmem:[%s185 + $0x80] sm:$0xff]
        %v240 = vld [vmem:[%s185 + $0x88] sm:$0xff]
        %v241 = vld [vmem:[%s185 + $0x90] sm:$0xff]
        %v242 = vld [vmem:[%s185 + $0x98] sm:$0xff]
        %v243 = vld [vmem:[%s185 + $0xa0] sm:$0xff]
        %v244 = vld [vmem:[%s185 + $0xa8] sm:$0xff]
        %v245 = vld [vmem:[%s185 + $0xb0] sm:$0xff]
        %v246 = vld [vmem:[%s185 + $0xb8] sm:$0xff]
        %v247 = vld [vmem:[%s185 + $0xc0] sm:$0xff]
        %v248 = vld [vmem:[%s185 + $0xc8] sm:$0xff]
        %v249 = vld [vmem:[%s185 + $0xd0] sm:$0xff]
        %v250 = vld [vmem:[%s185 + $0xd8] sm:$0xff]
        %v251 = vld [vmem:[%s185 + $0xe0] sm:$0xff]
        %v252 = vld [vmem:[%s185 + $0xe8] sm:$0xff]
        %v253 = vld [vmem:[%s185 + $0xf0] sm:$0xff]
        %v254 = vld [vmem:[%s185 + $0xf8] sm:$0xff]
        %v255 = vld [vmem:[%s185 + $0x100] sm:$0xff]
        %v256 = vld [vmem:[%s185 + $0x108] sm:$0xff]
        %v257 = vld [vmem:[%s185 + $0x110] sm:$0xff]
        %v258 = vld [vmem:[%s185 + $0x118] sm:$0xff]
        %v259 = vld [vmem:[%s185 + $0x120] sm:$0xff]
        %v260 = vld [vmem:[%s185 + $0x128] sm:$0xff]
        %v261 = vld [vmem:[%s185 + $0x130] sm:$0xff]
        %v262 = vld [vmem:[%s185 + $0x138] sm:$0xff]
        %v263 = vld [vmem:[%s185 + $0x140] sm:$0xff]
        %v264 = vld [vmem:[%s185 + $0x148] sm:$0xff]
        %v265 = vld [vmem:[%s185 + $0x150] sm:$0xff]
        %v266 = vld [vmem:[%s185 + $0x158] sm:$0xff]
        %v267 = vld [vmem:[%s185 + $0x160] sm:$0xff]
        %v268 = vld [vmem:[%s185 + $0x168] sm:$0xff]
        %v269 = vld [vmem:[%s185 + $0x170] sm:$0xff]
        %v270 = vld [vmem:[%s185 + $0x178] sm:$0xff]
        %v271 = vld [vmem:[%s185 + $0x180] sm:$0xff]
        %v272 = vld [vmem:[%s185 + $0x188] sm:$0xff]
        %v273 = vld [vmem:[%s185 + $0x190] sm:$0xff]
        %v274 = vld [vmem:[%s185 + $0x198] sm:$0xff]
        %v275 = vld [vmem:[%s185 + $0x1a0] sm:$0xff]
        %v276 = vld [vmem:[%s185 + $0x1a8] sm:$0xff]
        %v277 = vld [vmem:[%s185 + $0x1b0] sm:$0xff]
        %v278 = vld [vmem:[%s185 + $0x1b8] sm:$0xff]
        %v279 = vld [vmem:[%s185 + $0x1c0] sm:$0xff]
        %v280 = vld [vmem:[%s185 + $0x1c8] sm:$0xff]
        %v281 = vld [vmem:[%s185 + $0x1d0] sm:$0xff]
        %v282 = vld [vmem:[%s185 + $0x1d8] sm:$0xff]
        %v283 = vld [vmem:[%s185 + $0x1e0] sm:$0xff]
        %v284 = vld [vmem:[%s185 + $0x1e8] sm:$0xff]
        %v285 = vld [vmem:[%s185 + $0x1f0] sm:$0xff]
        %v286 = vld [vmem:[%s185 + $0x1f8] sm:$0xff]
        %v287 = vld [vmem:[%s194] sm:$0xff]
        %v288 = vld [vmem:[%s194 + $0x8] sm:$0xff]
        %v289 = vld [vmem:[%s194 + $0x10] sm:$0xff]
        %v290 = vld [vmem:[%s194 + $0x18] sm:$0xff]
        %v291 = vld [vmem:[%s194 + $0x20] sm:$0xff]
        %v292 = vld [vmem:[%s194 + $0x28] sm:$0xff]
        %v293 = vld [vmem:[%s194 + $0x30] sm:$0xff]
        %v294 = vld [vmem:[%s194 + $0x38] sm:$0xff]
        %v295 = vld [vmem:[%s194 + $0x40] sm:$0xff]
        %v296 = vld [vmem:[%s194 + $0x48] sm:$0xff]
        %v297 = vld [vmem:[%s194 + $0x50] sm:$0xff]
        %v298 = vld [vmem:[%s194 + $0x58] sm:$0xff]
        %v299 = vld [vmem:[%s194 + $0x60] sm:$0xff]
        %v300 = vld [vmem:[%s194 + $0x68] sm:$0xff]
        %v301 = vld [vmem:[%s194 + $0x70] sm:$0xff]
        %v302 = vld [vmem:[%s194 + $0x78] sm:$0xff]
        %v303 = vld [vmem:[%s194 + $0x80] sm:$0xff]
        %v304 = vld [vmem:[%s194 + $0x88] sm:$0xff]
        %v305 = vld [vmem:[%s194 + $0x90] sm:$0xff]
        %v306 = vld [vmem:[%s194 + $0x98] sm:$0xff]
        %v307 = vld [vmem:[%s194 + $0xa0] sm:$0xff]
        %v308 = vld [vmem:[%s194 + $0xa8] sm:$0xff]
        %v309 = vld [vmem:[%s194 + $0xb0] sm:$0xff]
        %v310 = vld [vmem:[%s194 + $0xb8] sm:$0xff]
        %v311 = vld [vmem:[%s194 + $0xc0] sm:$0xff]
        %v312 = vld [vmem:[%s194 + $0xc8] sm:$0xff]
        %v313 = vld [vmem:[%s194 + $0xd0] sm:$0xff]
        %v314 = vld [vmem:[%s194 + $0xd8] sm:$0xff]
        %v315 = vld [vmem:[%s194 + $0xe0] sm:$0xff]
        %v316 = vld [vmem:[%s194 + $0xe8] sm:$0xff]
        %v317 = vld [vmem:[%s194 + $0xf0] sm:$0xff]
        %v318 = vld [vmem:[%s194 + $0xf8] sm:$0xff]
        %v319 = vld [vmem:[%s194 + $0x100] sm:$0xff]
        %v320 = vld [vmem:[%s194 + $0x108] sm:$0xff]
        %v321 = vld [vmem:[%s194 + $0x110] sm:$0xff]
        %v322 = vld [vmem:[%s194 + $0x118] sm:$0xff]
        %v323 = vld [vmem:[%s194 + $0x120] sm:$0xff]
        %v324 = vld [vmem:[%s194 + $0x128] sm:$0xff]
        %v325 = vld [vmem:[%s194 + $0x130] sm:$0xff]
        %v326 = vld [vmem:[%s194 + $0x138] sm:$0xff]
        %v327 = vld [vmem:[%s194 + $0x140] sm:$0xff]
        %v328 = vld [vmem:[%s194 + $0x148] sm:$0xff]
        %v329 = vld [vmem:[%s194 + $0x150] sm:$0xff]
        %v330 = vld [vmem:[%s194 + $0x158] sm:$0xff]
        %v331 = vld [vmem:[%s194 + $0x160] sm:$0xff]
        %v332 = vld [vmem:[%s194 + $0x168] sm:$0xff]
        %v333 = vld [vmem:[%s194 + $0x170] sm:$0xff]
        %v334 = vld [vmem:[%s194 + $0x178] sm:$0xff]
        %v335 = vld [vmem:[%s194 + $0x180] sm:$0xff]
        %v336 = vld [vmem:[%s194 + $0x188] sm:$0xff]
        %v337 = vld [vmem:[%s194 + $0x190] sm:$0xff]
        %v338 = vld [vmem:[%s194 + $0x198] sm:$0xff]
        %v339 = vld [vmem:[%s194 + $0x1a0] sm:$0xff]
        %v340 = vld [vmem:[%s194 + $0x1a8] sm:$0xff]
        %v341 = vld [vmem:[%s194 + $0x1b0] sm:$0xff]
        %v342 = vld [vmem:[%s194 + $0x1b8] sm:$0xff]
        %v343 = vld [vmem:[%s194 + $0x1c0] sm:$0xff]
        %v344 = vld [vmem:[%s194 + $0x1c8] sm:$0xff]
        %v345 = vld [vmem:[%s194 + $0x1d0] sm:$0xff]
        %v346 = vld [vmem:[%s194 + $0x1d8] sm:$0xff]
        %v347 = vld [vmem:[%s194 + $0x1e0] sm:$0xff]
        %v348 = vld [vmem:[%s194 + $0x1e8] sm:$0xff]
        %v349 = vld [vmem:[%s194 + $0x1f0] sm:$0xff]
        %v350 = vld [vmem:[%s194 + $0x1f8] sm:$0xff]
        %v351 = vadd.f32 %v223, %v287
        %v352 = vadd.f32 %v224, %v288
        %v353 = vadd.f32 %v225, %v289
        %v354 = vadd.f32 %v226, %v290
        %v355 = vadd.f32 %v227, %v291
        %v356 = vadd.f32 %v228, %v292
        %v357 = vadd.f32 %v229, %v293
        %v358 = vadd.f32 %v230, %v294
        %v359 = vadd.f32 %v231, %v295
        %v360 = vadd.f32 %v232, %v296
        %v361 = vadd.f32 %v233, %v297
        %v362 = vadd.f32 %v234, %v298
        %v363 = vadd.f32 %v235, %v299
        %v364 = vadd.f32 %v236, %v300
        %v365 = vadd.f32 %v237, %v301
        %v366 = vadd.f32 %v238, %v302
        %v367 = vadd.f32 %v239, %v303
        %v368 = vadd.f32 %v240, %v304
        %v369 = vadd.f32 %v241, %v305
        %v370 = vadd.f32 %v242, %v306
        %v371 = vadd.f32 %v243, %v307
        %v372 = vadd.f32 %v244, %v308
        %v373 = vadd.f32 %v245, %v309
        %v374 = vadd.f32 %v246, %v310
        %v375 = vadd.f32 %v247, %v311
        %v376 = vadd.f32 %v248, %v312
        %v377 = vadd.f32 %v249, %v313
        %v378 = vadd.f32 %v250, %v314
        %v379 = vadd.f32 %v251, %v315
        %v380 = vadd.f32 %v252, %v316
        %v381 = vadd.f32 %v253, %v317
        %v382 = vadd.f32 %v254, %v318
        %v383 = vadd.f32 %v255, %v319
        %v384 = vadd.f32 %v256, %v320
        %v385 = vadd.f32 %v257, %v321
        %v386 = vadd.f32 %v258, %v322
        %v387 = vadd.f32 %v259, %v323
        %v388 = vadd.f32 %v260, %v324
        %v389 = vadd.f32 %v261, %v325
        %v390 = vadd.f32 %v262, %v326
        %v391 = vadd.f32 %v263, %v327
        %v392 = vadd.f32 %v264, %v328
        %v393 = vadd.f32 %v265, %v329
        %v394 = vadd.f32 %v266, %v330
        %v395 = vadd.f32 %v267, %v331
        %v396 = vadd.f32 %v268, %v332
        %v397 = vadd.f32 %v269, %v333
        %v398 = vadd.f32 %v270, %v334
        %v399 = vadd.f32 %v271, %v335
        %v400 = vadd.f32 %v272, %v336
        %v401 = vadd.f32 %v273, %v337
        %v402 = vadd.f32 %v274, %v338
        %v403 = vadd.f32 %v275, %v339
        %v404 = vadd.f32 %v276, %v340
        %v405 = vadd.f32 %v277, %v341
        %v406 = vadd.f32 %v278, %v342
        %v407 = vadd.f32 %v279, %v343
        %v408 = vadd.f32 %v280, %v344
        %v409 = vadd.f32 %v281, %v345
        %v410 = vadd.f32 %v282, %v346
        %v411 = vadd.f32 %v283, %v347
        %v412 = vadd.f32 %v284, %v348
        %v413 = vadd.f32 %v285, %v349
        %v414 = vadd.f32 %v286, %v350
        %v415 = vmul.f32 %v351, 0.5
        %v416 = vmul.f32 %v352, 0.5
        %v417 = vmul.f32 %v353, 0.5
        %v418 = vmul.f32 %v354, 0.5
        %v419 = vmul.f32 %v355, 0.5
        %v420 = vmul.f32 %v356, 0.5
        %v421 = vmul.f32 %v357, 0.5
        %v422 = vmul.f32 %v358, 0.5
        %v423 = vmul.f32 %v359, 0.5
        %v424 = vmul.f32 %v360, 0.5
        %v425 = vmul.f32 %v361, 0.5
        %v426 = vmul.f32 %v362, 0.5
        %v427 = vmul.f32 %v363, 0.5
        %v428 = vmul.f32 %v364, 0.5
        %v429 = vmul.f32 %v365, 0.5
        %v430 = vmul.f32 %v366, 0.5
        %v431 = vmul.f32 %v367, 0.5
        %v432 = vmul.f32 %v368, 0.5
        %v433 = vmul.f32 %v369, 0.5
        %v434 = vmul.f32 %v370, 0.5
        %v435 = vmul.f32 %v371, 0.5
        %v436 = vmul.f32 %v372, 0.5
        %v437 = vmul.f32 %v373, 0.5
        %v438 = vmul.f32 %v374, 0.5
        %v439 = vmul.f32 %v375, 0.5
        %v440 = vmul.f32 %v376, 0.5
        %v441 = vmul.f32 %v377, 0.5
        %v442 = vmul.f32 %v378, 0.5
        %v443 = vmul.f32 %v379, 0.5
        %v444 = vmul.f32 %v380, 0.5
        %v445 = vmul.f32 %v381, 0.5
        %v446 = vmul.f32 %v382, 0.5
        %v447 = vmul.f32 %v383, 0.5
        %v448 = vmul.f32 %v384, 0.5
        %v449 = vmul.f32 %v385, 0.5
        %v450 = vmul.f32 %v386, 0.5
        %v451 = vmul.f32 %v387, 0.5
        %v452 = vmul.f32 %v388, 0.5
        %v453 = vmul.f32 %v389, 0.5
        %v454 = vmul.f32 %v390, 0.5
        %v455 = vmul.f32 %v391, 0.5
        %v456 = vmul.f32 %v392, 0.5
        %v457 = vmul.f32 %v393, 0.5
        %v458 = vmul.f32 %v394, 0.5
        %v459 = vmul.f32 %v395, 0.5
        %v460 = vmul.f32 %v396, 0.5
        %v461 = vmul.f32 %v397, 0.5
        %v462 = vmul.f32 %v398, 0.5
        %v463 = vmul.f32 %v399, 0.5
        %v464 = vmul.f32 %v400, 0.5
        %v465 = vmul.f32 %v401, 0.5
        %v466 = vmul.f32 %v402, 0.5
        %v467 = vmul.f32 %v403, 0.5
        %v468 = vmul.f32 %v404, 0.5
        %v469 = vmul.f32 %v405, 0.5
        %v470 = vmul.f32 %v406, 0.5
        %v471 = vmul.f32 %v407, 0.5
        %v472 = vmul.f32 %v408, 0.5
        %v473 = vmul.f32 %v409, 0.5
        %v474 = vmul.f32 %v410, 0.5
        %v475 = vmul.f32 %v411, 0.5
        %v476 = vmul.f32 %v412, 0.5
        %v477 = vmul.f32 %v413, 0.5
        %v478 = vmul.f32 %v414, 0.5
        %479 = vst [vmem:[%s219] sm:$0xff] %v415
        %480 = vst [vmem:[%s219 + $0x8] sm:$0xff] %v416
        %481 = vst [vmem:[%s219 + $0x10] sm:$0xff] %v417
        %482 = vst [vmem:[%s219 + $0x18] sm:$0xff] %v418
        %483 = vst [vmem:[%s219 + $0x20] sm:$0xff] %v419
        %484 = vst [vmem:[%s219 + $0x28] sm:$0xff] %v420
        %485 = vst [vmem:[%s219 + $0x30] sm:$0xff] %v421
        %486 = vst [vmem:[%s219 + $0x38] sm:$0xff] %v422
        %487 = vst [vmem:[%s219 + $0x40] sm:$0xff] %v423
        %488 = vst [vmem:[%s219 + $0x48] sm:$0xff] %v424
        %489 = vst [vmem:[%s219 + $0x50] sm:$0xff] %v425
        %490 = vst [vmem:[%s219 + $0x58] sm:$0xff] %v426
        %491 = vst [vmem:[%s219 + $0x60] sm:$0xff] %v427
        %492 = vst [vmem:[%s219 + $0x68] sm:$0xff] %v428
        %493 = vst [vmem:[%s219 + $0x70] sm:$0xff] %v429
        %494 = vst [vmem:[%s219 + $0x78] sm:$0xff] %v430
        %495 = vst [vmem:[%s219 + $0x80] sm:$0xff] %v431
        %496 = vst [vmem:[%s219 + $0x88] sm:$0xff] %v432
        %497 = vst [vmem:[%s219 + $0x90] sm:$0xff] %v433
        %498 = vst [vmem:[%s219 + $0x98] sm:$0xff] %v434
        %499 = vst [vmem:[%s219 + $0xa0] sm:$0xff] %v435
        %500 = vst [vmem:[%s219 + $0xa8] sm:$0xff] %v436
        %501 = vst [vmem:[%s219 + $0xb0] sm:$0xff] %v437
        %502 = vst [vmem:[%s219 + $0xb8] sm:$0xff] %v438
        %503 = vst [vmem:[%s219 + $0xc0] sm:$0xff] %v439
        %504 = vst [vmem:[%s219 + $0xc8] sm:$0xff] %v440
        %505 = vst [vmem:[%s219 + $0xd0] sm:$0xff] %v441
        %506 = vst [vmem:[%s219 + $0xd8] sm:$0xff] %v442
        %507 = vst [vmem:[%s219 + $0xe0] sm:$0xff] %v443
        %508 = vst [vmem:[%s219 + $0xe8] sm:$0xff] %v444
        %509 = vst [vmem:[%s219 + $0xf0] sm:$0xff] %v445
        %510 = vst [vmem:[%s219 + $0xf8] sm:$0xff] %v446
        %511 = vst [vmem:[%s219 + $0x100] sm:$0xff] %v447
        %512 = vst [vmem:[%s219 + $0x108] sm:$0xff] %v448
        %513 = vst [vmem:[%s219 + $0x110] sm:$0xff] %v449
        %514 = vst [vmem:[%s219 + $0x118] sm:$0xff] %v450
        %515 = vst [vmem:[%s219 + $0x120] sm:$0xff] %v451
        %516 = vst [vmem:[%s219 + $0x128] sm:$0xff] %v452
        %517 = vst [vmem:[%s219 + $0x130] sm:$0xff] %v453
        %518 = vst [vmem:[%s219 + $0x138] sm:$0xff] %v454
        %519 = vst [vmem:[%s219 + $0x140] sm:$0xff] %v455
        %520 = vst [vmem:[%s219 + $0x148] sm:$0xff] %v456
        %521 = vst [vmem:[%s219 + $0x150] sm:$0xff] %v457
        %522 = vst [vmem:[%s219 + $0x158] sm:$0xff] %v458
        %523 = vst [vmem:[%s219 + $0x160] sm:$0xff] %v459
        %524 = vst [vmem:[%s219 + $0x168] sm:$0xff] %v460
        %525 = vst [vmem:[%s219 + $0x170] sm:$0xff] %v461
        %526 = vst [vmem:[%s219 + $0x178] sm:$0xff] %v462
        %527 = vst [vmem:[%s219 + $0x180] sm:$0xff] %v463
        %528 = vst [vmem:[%s219 + $0x188] sm:$0xff] %v464
        %529 = vst [vmem:[%s219 + $0x190] sm:$0xff] %v465
        %530 = vst [vmem:[%s219 + $0x198] sm:$0xff] %v466
        %531 = vst [vmem:[%s219 + $0x1a0] sm:$0xff] %v467
        %532 = vst [vmem:[%s219 + $0x1a8] sm:$0xff] %v468
        %533 = vst [vmem:[%s219 + $0x1b0] sm:$0xff] %v469
        %534 = vst [vmem:[%s219 + $0x1b8] sm:$0xff] %v470
        %535 = vst [vmem:[%s219 + $0x1c0] sm:$0xff] %v471
        %536 = vst [vmem:[%s219 + $0x1c8] sm:$0xff] %v472
        %537 = vst [vmem:[%s219 + $0x1d0] sm:$0xff] %v473
        %538 = vst [vmem:[%s219 + $0x1d8] sm:$0xff] %v474
        %539 = vst [vmem:[%s219 + $0x1e0] sm:$0xff] %v475
        %540 = vst [vmem:[%s219 + $0x1e8] sm:$0xff] %v476
        %541 = vst [vmem:[%s219 + $0x1f0] sm:$0xff] %v477
        %542 = vst [vmem:[%s219 + $0x1f8] sm:$0xff] %v478
        %s543 = sand.u32 %s100, 1
        %s544 = scalar_lea.sflag [#allocation4], %s543
        %s545 = sand.u32 %s100, 1
        %s546 = smul.addr %s545, 512
        %s547 = scalar_lea.vmem [#allocation7], %s546
        // Predicated region
        $region37: #{tpu_custom_call.1} parent=27 // pred_check
          %p548 = pneg %p110
        $region38: #{tpu_custom_call.1} parent=27 // pred_check_branch
          %550 = sbr.rel (%p548) target = $region40
        $region39: #{tpu_custom_call.1} parent=27 // pred_region
          %s551 = smul.u32 64, %s27
          %s553 = ssub.s32 8192, 8192
          %554 = vsyncadd %s544, %s553
          %s555 = smul.addr %s26, 64
          %s556 = sadd.s32 %s551, %s555
          %s557 = smul.addr %s556, 128
          %s558 = scalar_lea.hbm %s2, %s557
          %s560 = sshll.u32 %s547, 4
          %s561 = int_to_ptr.vmem [resolvable:$true] %s560
          %563 = dma.vmem_to_hbm [thread:$0]  %s561, 8192, %s558, %s544
        $region40: #{tpu_custom_call.1} parent=27 // pred_fallthru
          _
      $region28: #{tpu_custom_call.1} parent=5 // pred_fallthru
        _
      %p564 = scmp.le.s32.totalorder 2, %s17
      // Predicated region
      $region41: #{tpu_custom_call.1} parent=5 // pred_check
        %p565 = pneg %p564
      $region42: #{tpu_custom_call.1} parent=5 // pred_check_branch
        %567 = sbr.rel (%p565) target = $region44
      $region43: #{tpu_custom_call.1} parent=5 // pred_region
        %s568 = ssub.s32 %s17, 2
        // Predicated region
        $region45: #{tpu_custom_call.1} parent=43 // pred_check
          %p569 = pneg %p116
        $region46: #{tpu_custom_call.1} parent=43 // pred_check_branch
          %571 = sbr.rel (%p569) target = $region48
        $region47: #{tpu_custom_call.1} parent=43 // pred_region
          %s572 = sand.u32 %s101, 1
          %s573 = scalar_lea.sflag [#allocation4], %s572
          %s574 = sand.u32 %s101, 1
          %s575 = smul.addr %s574, 512
          %s576 = scalar_lea.vmem [#allocation7], %s575
          %577 = dma.done %s573, 8192
        $region48: #{tpu_custom_call.1} parent=43 // pred_fallthru
          _
      $region44: #{tpu_custom_call.1} parent=5 // pred_fallthru
        _
    $region6: #{tpu_custom_call.1} parent=1 // loop_footer
      %s21 = sadd.s32 1, %s17
    $region7: #{tpu_custom_call.1} parent=1 // loop_footer_branch
      %16 = sbr.rel target = $region3
    $region8: #{tpu_custom_call.1} parent=1 // loop_exit
      _
    %578 = vsyncpa [#allocation3], 1
    %s579 = scalar_lea.sflag [#allocation3], 1
    %580 = vsyncpa %s579, 1
    %581 = vsyncpa [#allocation6], 1
    %s582 = scalar_lea.sflag [#allocation6], 1
    %583 = vsyncpa %s582, 1
    %584 = vsyncpa [#allocation4], 1
    %s585 = scalar_lea.sflag [#allocation4], 1
    %586 = vsyncpa %s585, 1

</llo_original>
